<compile_context>
chip_gen: v7x
topology: tpu7x:2x2x1
jax: 0.10.0
libtpu: 0.0.40
codegen_flags: <defaults>
</compile_context>

<pallas_src>
import functools
import math

import jax
import jax.numpy as jnp
from jax.experimental import pallas as pl
from jax.experimental.pallas import tpu as pltpu


def _round_up(n, m):
    return ((n + m - 1) // m) * m


def _mlp_kernel(x_ref, w1_ref, b1_ref, w2_ref, b2_ref, w3_ref, b3_ref, o_ref,
                *, compute_dtype):
    # x_ref: (TB, FIN) raw input tile; the module's `x[:, :4]` is applied here.
    x = x_ref[:, :4].astype(compute_dtype)

    h1 = jnp.dot(x, w1_ref[...], preferred_element_type=jnp.float32)
    h1 = jnp.tanh(h1 + b1_ref[...].astype(jnp.float32)).astype(compute_dtype)

    h2 = jnp.dot(h1, w2_ref[...], preferred_element_type=jnp.float32)
    h2 = jnp.tanh(h2 + b2_ref[...].astype(jnp.float32)).astype(compute_dtype)

    out = jnp.dot(h2, w3_ref[...], preferred_element_type=jnp.float32)
    out = out + b3_ref[...].astype(jnp.float32)
    o_ref[...] = out.astype(o_ref.dtype)


def simple_net_big_data(x, params, *, tb=4096, compute_dtype=jnp.float32):
    """x: (B, F) with F >= 4. Returns (B, 3) float32.

    compute_dtype: jnp.float32 (default; use on v5e) or jnp.bfloat16
    (recommended on v6e/v7x: native bf16 MXU, halved x/h VMEM + DMA).
    """
    w1, b1, w2, b2, w3, b3 = params
    B, F = x.shape
    assert F >= 4, "forward slices x[:, :4]; need at least 4 input features"

    # Only the first 4 columns are consumed; when F is wide, clamp the DMA'd
    # block to 128 lanes (divisible-by-128 requirement) instead of all F.
    fin = F if F <= 128 else 128
    x_item = jnp.dtype(x.dtype).itemsize
    c_item = jnp.dtype(compute_dtype).itemsize

    # ---- batch tile selection -------------------------------------------
    # Large tile to amortize the ~600-cycle grid-step overhead, but:
    #  * sublane aligned (multiple of 8),
    #  * >= 2 grid steps whenever B > 8 so the "parallel" axis can shard
    #    across v7x's two TensorCores,
    #  * shrunk until the per-tile VMEM budget fits the scoped limit we set.
    tb = max(8, (tb // 8) * 8)
    if B <= 8:
        tb_eff = min(tb, 8)
    else:
        tb_eff = min(tb, _round_up(-(-B // 2), 8))

    def vmem_budget(t):
        lane = 128
        x_buf = t * _round_up(fin, lane) * x_item * 2   # x tile, double-buffered
        o_buf = t * lane * 4 * 2                        # (t,3) out, lane-padded f32, 2 bufs
        h_tmp = 2 * t * lane * 4                        # h1/h2 temporaries (f32, conservative)
        wts = 1 << 20                                   # padded weights/biases + slack
        return x_buf + o_buf + h_tmp + wts

    VMEM_TARGET = 40 << 20  # comfortably under v7x's 64 MiB physical per TC
    while tb_eff > 8 and vmem_budget(tb_eff) > VMEM_TARGET:
        tb_eff = max(8, ((tb_eff // 2) // 8) * 8)
    vmem_limit = int(min(max(vmem_budget(tb_eff) + (8 << 20), 32 << 20), 56 << 20))

    grid = (pl.cdiv(B, tb_eff),)

    # Weights in compute dtype (tiny cast); biases stay f32 (added post-matmul).
    w1c = w1.astype(compute_dtype)
    w2c = w2.astype(compute_dtype)
    w3c = w3.astype(compute_dtype)

    full = lambda shape: pl.BlockSpec(shape, lambda i: (0, 0))

    # Advisory cost model (only the DMA'd input columns are counted).
    flops = 2 * B * (4 * 64 + 64 * 64 + 64 * 3)
    transcendentals = 2 * 64 * B
    weight_bytes = c_item * (4 * 64 + 64 * 64 + 64 * 3) + 4 * (64 + 64 + 3)
    bytes_accessed = B * fin * x_item + B * 3 * 4 + weight_bytes

    kernel = functools.partial(_mlp_kernel, compute_dtype=compute_dtype)

    return pl.pallas_call(
        kernel,
        out_shape=jax.ShapeDtypeStruct((B, 3), jnp.float32),
        grid_spec=pltpu.PrefetchScalarGridSpec(
            num_scalar_prefetch=0,
            grid=grid,
            in_specs=[
                pl.BlockSpec((tb_eff, fin), lambda i: (i, 0)),  # x tile (first fin cols)
                full((4, 64)),                                  # w1
                full((1, 64)),                                  # b1
                full((64, 64)),                                 # w2
                full((1, 64)),                                  # b2
                full((64, 3)),                                  # w3
                full((1, 3)),                                   # b3
            ],
            out_specs=pl.BlockSpec((tb_eff, 3), lambda i: (i, 0)),
        ),
        compiler_params=pltpu.CompilerParams(
            dimension_semantics=("parallel",),
            vmem_limit_bytes=vmem_limit,
        ),
        cost_estimate=pl.CostEstimate(
            flops=flops,
            transcendentals=transcendentals,
            bytes_accessed=bytes_accessed,
        ),
    )(x, w1c, b1, w2c, b2, w3c, b3)


def _xavier_uniform(key, fan_in, fan_out, dtype=jnp.float32):
    # torch.nn.init.xavier_uniform_ on a (out, in) weight; stored transposed
    # as (in, out) — the bound is symmetric so this is equivalent.
    bound = math.sqrt(6.0 / (fan_in + fan_out))
    return jax.random.uniform(key, (fan_in, fan_out), dtype, -bound, bound)


def _linear_bias(key, fan_in, fan_out, dtype=jnp.float32):
    # PyTorch default Linear bias init: U(-1/sqrt(fan_in), 1/sqrt(fan_in)).
    bound = 1.0 / math.sqrt(fan_in)
    return jax.random.uniform(key, (1, fan_out), dtype, -bound, bound)


def init_params(key):
    k = jax.random.split(key, 6)
    w1 = _xavier_uniform(k[0], 4, 64)
    b1 = _linear_bias(k[1], 4, 64)
    w2 = _xavier_uniform(k[2], 64, 64)
    b2 = _linear_bias(k[3], 64, 64)
    w3 = _xavier_uniform(k[4], 64, 3)
    b3 = _linear_bias(k[5], 64, 3)
    return (w1, b1, w2, b2, w3, b3)


def _reference(x, params):
    w1, b1, w2, b2, w3, b3 = params
    h = jnp.tanh(x[:, :4] @ w1 + b1)
    h = jnp.tanh(h @ w2 + b2)
    return h @ w3 + b3


if __name__ == "__main__":
    key = jax.random.PRNGKey(0)
    kp, kx1, kx2, kx3 = jax.random.split(key, 4)
    params = init_params(kp)

    # Small input consistent with the forward: batch=8, 6 input features
    # (forward only uses the first 4 columns). Single grid step.
    x_small = jax.random.normal(kx1, (8, 6), jnp.float32)
    out_small = jax.block_until_ready(simple_net_big_data(x_small, params))
    ref_small = _reference(x_small, params)
    assert out_small.shape == (8, 3)
    assert jnp.allclose(out_small, ref_small, atol=1e-5, rtol=1e-5), (
        "mismatch vs reference (small batch)")

    # Non-divisible batch exercises the >=2-step grid + clipped-final-block path.
    x_odd = jax.random.normal(kx2, (300, 6), jnp.float32)
    out_odd = jax.block_until_ready(simple_net_big_data(x_odd, params))
    ref_odd = _reference(x_odd, params)
    assert out_odd.shape == (300, 3)
    assert jnp.allclose(out_odd, ref_odd, atol=1e-5, rtol=1e-5), (
        "mismatch vs reference (non-divisible batch)")

    # Wide-feature input exercises the fin=128 DMA clamp (only first 4 cols used).
    x_wide = jax.random.normal(kx3, (64, 200), jnp.float32)
    out_wide = jax.block_until_ready(simple_net_big_data(x_wide, params))
    ref_wide = _reference(x_wide, params)
    assert out_wide.shape == (64, 3)
    assert jnp.allclose(out_wide, ref_wide, atol=1e-5, rtol=1e-5), (
        "mismatch vs reference (wide features)")

    # bf16 compute path (v6e/v7x optimization); looser tolerance vs f32 reference.
    out_bf16 = jax.block_until_ready(
        simple_net_big_data(x_odd, params, compute_dtype=jnp.bfloat16))
    assert out_bf16.shape == (300, 3)
    assert jnp.allclose(out_bf16, ref_odd, atol=5e-2, rtol=5e-2), (
        "mismatch vs reference (bf16 compute)")

    print("KERNEL_OK")
</pallas_src>

<mosaic_0001>
module attributes {stable_mosaic.version = 11 : i64} {
  func.func @_mlp_kernel(%arg0: i32, %arg1: memref<8x6xf32, #tpu.memory_space<vmem>>, %arg2: memref<4x64xf32, #tpu.memory_space<vmem>>, %arg3: memref<1x64xf32, #tpu.memory_space<vmem>>, %arg4: memref<64x64xf32, #tpu.memory_space<vmem>>, %arg5: memref<1x64xf32, #tpu.memory_space<vmem>>, %arg6: memref<64x3xf32, #tpu.memory_space<vmem>>, %arg7: memref<1x3xf32, #tpu.memory_space<vmem>>, %arg8: memref<8x3xf32, #tpu.memory_space<vmem>>) attributes {dimension_semantics = [#tpu.dimension_semantics<parallel>], iteration_bounds = array<i64: 1>, scalar_prefetch = 0 : i64, scratch_operands = 0 : i64, tpu.core_type = #tpu.core_type<tc>, window_params = [{transform_indices = @transform_0, window_bounds = array<i64: 8, 6>}, {pipeline_mode = #tpu.pipeline_mode<synchronous>, transform_indices = @transform_1, window_bounds = array<i64: 4, 64>}, {pipeline_mode = #tpu.pipeline_mode<synchronous>, transform_indices = @transform_2, window_bounds = array<i64: 1, 64>}, {pipeline_mode = #tpu.pipeline_mode<synchronous>, transform_indices = @transform_3, window_bounds = array<i64: 64, 64>}, {pipeline_mode = #tpu.pipeline_mode<synchronous>, transform_indices = @transform_4, window_bounds = array<i64: 1, 64>}, {pipeline_mode = #tpu.pipeline_mode<synchronous>, transform_indices = @transform_5, window_bounds = array<i64: 64, 3>}, {pipeline_mode = #tpu.pipeline_mode<synchronous>, transform_indices = @transform_6, window_bounds = array<i64: 1, 3>}, {transform_indices = @transform_7, window_bounds = array<i64: 8, 3>}]} {
    %c0 = arith.constant 0 : index
    %c0_0 = arith.constant 0 : index
    %0 = vector.load %arg1[%c0, %c0_0] : memref<8x6xf32, #tpu.memory_space<vmem>>, vector<8x4xf32>
    %c0_1 = arith.constant 0 : index
    %c0_2 = arith.constant 0 : index
    %1 = vector.load %arg2[%c0_1, %c0_2] : memref<4x64xf32, #tpu.memory_space<vmem>>, vector<4x64xf32>
    %cst = arith.constant dense<0.000000e+00> : vector<8x64xf32>
    %2 = tpu.matmul %0, %1, %cst {dimension_numbers = #tpu.dot_dimension_numbers<[1], [0], [0], [1], [0, 0, 1, 1], [], []>} : vector<8x4xf32>, vector<4x64xf32>, vector<8x64xf32> -> vector<8x64xf32>
    %c0_3 = arith.constant 0 : index
    %c0_4 = arith.constant 0 : index
    %3 = vector.load %arg3[%c0_3, %c0_4] : memref<1x64xf32, #tpu.memory_space<vmem>>, vector<1x64xf32>
    %4 = vector.broadcast %3 : vector<1x64xf32> to vector<8x64xf32>
    %5 = arith.addf %2, %4 : vector<8x64xf32>
    %6 = math.tanh %5 : vector<8x64xf32>
    %c0_5 = arith.constant 0 : index
    %c0_6 = arith.constant 0 : index
    %7 = vector.load %arg4[%c0_5, %c0_6] : memref<64x64xf32, #tpu.memory_space<vmem>>, vector<64x64xf32>
    %cst_7 = arith.constant dense<0.000000e+00> : vector<8x64xf32>
    %8 = tpu.matmul %6, %7, %cst_7 {dimension_numbers = #tpu.dot_dimension_numbers<[1], [0], [0], [1], [0, 0, 1, 1], [], []>} : vector<8x64xf32>, vector<64x64xf32>, vector<8x64xf32> -> vector<8x64xf32>
    %c0_8 = arith.constant 0 : index
    %c0_9 = arith.constant 0 : index
    %9 = vector.load %arg5[%c0_8, %c0_9] : memref<1x64xf32, #tpu.memory_space<vmem>>, vector<1x64xf32>
    %10 = vector.broadcast %9 : vector<1x64xf32> to vector<8x64xf32>
    %11 = arith.addf %8, %10 : vector<8x64xf32>
    %12 = math.tanh %11 : vector<8x64xf32>
    %c0_10 = arith.constant 0 : index
    %c0_11 = arith.constant 0 : index
    %13 = vector.load %arg6[%c0_10, %c0_11] : memref<64x3xf32, #tpu.memory_space<vmem>>, vector<64x3xf32>
    %cst_12 = arith.constant dense<0.000000e+00> : vector<8x3xf32>
    %14 = tpu.matmul %12, %13, %cst_12 {dimension_numbers = #tpu.dot_dimension_numbers<[1], [0], [0], [1], [0, 0, 1, 1], [], []>} : vector<8x64xf32>, vector<64x3xf32>, vector<8x3xf32> -> vector<8x3xf32>
    %c0_13 = arith.constant 0 : index
    %c0_14 = arith.constant 0 : index
    %15 = vector.load %arg7[%c0_13, %c0_14] : memref<1x3xf32, #tpu.memory_space<vmem>>, vector<1x3xf32>
    %16 = vector.broadcast %15 : vector<1x3xf32> to vector<8x3xf32>
    %17 = arith.addf %14, %16 : vector<8x3xf32>
    %c0_15 = arith.constant 0 : index
    %c0_16 = arith.constant 0 : index
    %18 = vector.load %arg8[%c0_15, %c0_16] : memref<8x3xf32, #tpu.memory_space<vmem>>, vector<8x3xf32>
    tpu.vector_store %arg8[%c0_15, %c0_16], %17 {strides = array<i32>} : memref<8x3xf32, #tpu.memory_space<vmem>>, vector<8x3xf32>,
    return
  }
  func.func @transform_0(%arg0: i32) -> (i32, i32) {
    %c0_i32 = arith.constant 0 : i32
    %c0_i32_0 = arith.constant 0 : i32
    return %arg0, %c0_i32 : i32, i32
  }
  func.func @transform_1(%arg0: i32) -> (i32, i32) {
    %c0_i32 = arith.constant 0 : i32
    %c0_i32_0 = arith.constant 0 : i32
    %c0_i32_1 = arith.constant 0 : i32
    return %c0_i32, %c0_i32_0 : i32, i32
  }
  func.func @transform_2(%arg0: i32) -> (i32, i32) {
    %c0_i32 = arith.constant 0 : i32
    %c0_i32_0 = arith.constant 0 : i32
    %c0_i32_1 = arith.constant 0 : i32
    return %c0_i32, %c0_i32_0 : i32, i32
  }
  func.func @transform_3(%arg0: i32) -> (i32, i32) {
    %c0_i32 = arith.constant 0 : i32
    %c0_i32_0 = arith.constant 0 : i32
    %c0_i32_1 = arith.constant 0 : i32
    return %c0_i32, %c0_i32_0 : i32, i32
  }
  func.func @transform_4(%arg0: i32) -> (i32, i32) {
    %c0_i32 = arith.constant 0 : i32
    %c0_i32_0 = arith.constant 0 : i32
    %c0_i32_1 = arith.constant 0 : i32
    return %c0_i32, %c0_i32_0 : i32, i32
  }
  func.func @transform_5(%arg0: i32) -> (i32, i32) {
    %c0_i32 = arith.constant 0 : i32
    %c0_i32_0 = arith.constant 0 : i32
    %c0_i32_1 = arith.constant 0 : i32
    return %c0_i32, %c0_i32_0 : i32, i32
  }
  func.func @transform_6(%arg0: i32) -> (i32, i32) {
    %c0_i32 = arith.constant 0 : i32
    %c0_i32_0 = arith.constant 0 : i32
    %c0_i32_1 = arith.constant 0 : i32
    return %c0_i32, %c0_i32_0 : i32, i32
  }
  func.func @transform_7(%arg0: i32) -> (i32, i32) {
    %c0_i32 = arith.constant 0 : i32
    %c0_i32_0 = arith.constant 0 : i32
    return %arg0, %c0_i32 : i32, i32
  }
}

</mosaic_0001>

<llo_original>
// kernel: tpu_custom_call.1
$region0: #{tpu_custom_call.1}
  #allocation0 [shape = 'u32[]', space=smem, size = 0x4, offset = 0x4, fixed_abs, tag = 'smem constant byte address 0x4 - core index']
  #allocation1 [shape = 'u32[144,128]{1,0:T(1,128)}', space=vmem, size = 0x12000, scoped, tag = 'internal scratch']
  %s0 = inlined_call_operand.vmem [shape: f32[8,6], index: 0, kind: input, shape index: {}]
  %s1 = inlined_call_operand.vmem [shape: f32[4,64], index: 1, kind: input, shape index: {}]
  %s2 = inlined_call_operand.vmem [shape: f32[1,64], index: 2, kind: input, shape index: {}]
  %s3 = inlined_call_operand.vmem [shape: f32[64,64], index: 3, kind: input, shape index: {}]
  %s4 = inlined_call_operand.vmem [shape: f32[1,64], index: 4, kind: input, shape index: {}]
  %s5 = inlined_call_operand.vmem [shape: f32[64,3], index: 5, kind: input, shape index: {}]
  %s6 = inlined_call_operand.vmem [shape: f32[1,3], index: 6, kind: input, shape index: {}]
  %s7 = inlined_call_operand.vmem [shape: f32[8,3], index: 7, kind: output, shape index: {}]
  %s8 = sld [smem:[#allocation0]]
  $region38: #{tpu_custom_call.1} parent=0
    _
  %s10 = ssub.s32 1, %s8
  %s11 = scalar_select 0, %s10, %s8
  // Predicated region
  $region2: #{tpu_custom_call.1} parent=0 // pred_check
    _
  $region3: #{tpu_custom_call.1} parent=0 // pred_check_branch
    %13 = sbr.rel (0) target = $region5
  $region4: #{tpu_custom_call.1} parent=0 // pred_region
    _
  $region5: #{tpu_custom_call.1} parent=0 // pred_fallthru
    _
  // Predicated region
  $region6: #{tpu_custom_call.1} parent=0 // pred_check
    _
  $region7: #{tpu_custom_call.1} parent=0 // pred_check_branch
    %15 = sbr.rel (0) target = $region9
  $region8: #{tpu_custom_call.1} parent=0 // pred_region
    _
  $region9: #{tpu_custom_call.1} parent=0 // pred_fallthru
    _
  // Predicated region
  $region10: #{tpu_custom_call.1} parent=0 // pred_check
    _
  $region11: #{tpu_custom_call.1} parent=0 // pred_check_branch
    %17 = sbr.rel (0) target = $region13
  $region12: #{tpu_custom_call.1} parent=0 // pred_region
    _
  $region13: #{tpu_custom_call.1} parent=0 // pred_fallthru
    _
  // Predicated region
  $region14: #{tpu_custom_call.1} parent=0 // pred_check
    _
  $region15: #{tpu_custom_call.1} parent=0 // pred_check_branch
    %19 = sbr.rel (0) target = $region17
  $region16: #{tpu_custom_call.1} parent=0 // pred_region
    _
  $region17: #{tpu_custom_call.1} parent=0 // pred_fallthru
    _
  // Predicated region
  $region18: #{tpu_custom_call.1} parent=0 // pred_check
    _
  $region19: #{tpu_custom_call.1} parent=0 // pred_check_branch
    %21 = sbr.rel (0) target = $region21
  $region20: #{tpu_custom_call.1} parent=0 // pred_region
    _
  $region21: #{tpu_custom_call.1} parent=0 // pred_fallthru
    _
  // Predicated region
  $region22: #{tpu_custom_call.1} parent=0 // pred_check
    _
  $region23: #{tpu_custom_call.1} parent=0 // pred_check_branch
    %23 = sbr.rel (0) target = $region25
  $region24: #{tpu_custom_call.1} parent=0 // pred_region
    _
  $region25: #{tpu_custom_call.1} parent=0 // pred_fallthru
    _
  // Predicated region
  $region26: #{tpu_custom_call.1} parent=0 // pred_check
    _
  $region27: #{tpu_custom_call.1} parent=0 // pred_check_branch
    %25 = sbr.rel (0) target = $region29
  $region28: #{tpu_custom_call.1} parent=0 // pred_region
    _
  $region29: #{tpu_custom_call.1} parent=0 // pred_fallthru
    _
  %v26 = vld [vmem:[%s0] sm:$0xff]
  %v27 = vld [vmem:[%s1] sm:$0xf]
  %v28 = vld [vmem:[%s2] sm:$0x1]
  %v30 = vlaneseq
  %v31 = vshrl.u32 %v30, 7
  %v32 = vsub.s32 0, %v31
  %v33 = vrot.slane %v28, %v32
  %vm35 = vcmask 31744
  %v37 = vsel %vm35, %v26, 0
  %vm39 = vcmask 1043456
  %v41 = vsel %vm39, %v27, 0
  %43 = vmatprep.subr.mxu0 0.0
  %44 = vmatpush1.msra.mxu0 %v41
  %45 = vmatprep.subr.mxu0 0.0
  %46 = vmatpush1.msra.mxu0 0.0
  %47 = vmatprep.subr.mxu0 0.0
  %48 = vmatpush1.msra.mxu0 0.0
  %49 = vmatprep.subr.mxu0 0.0
  %50 = vmatpush1.msra.mxu0 0.0
  %51 = vmatprep.subr.mxu0 0.0
  %52 = vmatpush1.msra.mxu0 0.0
  %53 = vmatprep.subr.mxu0 0.0
  %54 = vmatpush1.msra.mxu0 0.0
  %55 = vmatprep.subr.mxu0 0.0
  %56 = vmatpush1.msra.mxu0 0.0
  %57 = vmatprep.subr.mxu0 0.0
  %58 = vmatpush1.msra.mxu0 0.0
  %59 = vmatprep.subr.mxu0 0.0
  %60 = vmatpush1.msra.mxu0 0.0
  %61 = vmatprep.subr.mxu0 0.0
  %62 = vmatpush1.msra.mxu0 0.0
  %63 = vmatprep.subr.mxu0 0.0
  %64 = vmatpush1.msra.mxu0 0.0
  %65 = vmatprep.subr.mxu0 0.0
  %66 = vmatpush1.msra.mxu0 0.0
  %67 = vmatprep.subr.mxu0 0.0
  %68 = vmatpush1.msra.mxu0 0.0
  %69 = vmatprep.subr.mxu0 0.0
  %70 = vmatpush1.msra.mxu0 0.0
  %71 = vmatprep.subr.mxu0 0.0
  %72 = vmatpush1.msra.mxu0 0.0
  %73 = vmatprep.subr.mxu0 0.0
  %74 = vmatpush1.msra.mxu0 0.0
  %75 = vmatprep.subr.mxu0 0.0
  %76 = vmatpush1.msra.mxu0 0.0
  %77 = vmatprep.subr.mxu0 0.0
  %78 = vmatpush1.msra.mxu0 0.0
  %79 = vmatprep.subr.mxu0 0.0
  %80 = vmatpush1.msra.mxu0 0.0
  %81 = vmatprep.subr.mxu0 0.0
  %82 = vmatpush1.msra.mxu0 0.0
  %83 = vmatprep.subr.mxu0 0.0
  %84 = vmatpush1.msra.mxu0 0.0
  %85 = vmatprep.subr.mxu0 0.0
  %86 = vmatpush1.msra.mxu0 0.0
  %87 = vmatprep.subr.mxu0 0.0
  %88 = vmatpush1.msra.mxu0 0.0
  %89 = vmatprep.subr.mxu0 0.0
  %90 = vmatpush1.msra.mxu0 0.0
  %91 = vmatprep.subr.mxu0 0.0
  %92 = vmatpush1.msra.mxu0 0.0
  %93 = vmatprep.subr.mxu0 0.0
  %94 = vmatpush1.msra.mxu0 0.0
  %95 = vmatprep.subr.mxu0 0.0
  %96 = vmatpush1.msra.mxu0 0.0
  %97 = vmatprep.subr.mxu0 0.0
  %98 = vmatpush1.msra.mxu0 0.0
  %99 = vmatprep.subr.mxu0 0.0
  %100 = vmatpush1.msra.mxu0 0.0
  %101 = vmatprep.subr.mxu0 0.0
  %102 = vmatpush1.msra.mxu0 0.0
  %103 = vmatprep.subr.mxu0 0.0
  %104 = vmatpush1.msra.mxu0 0.0
  %105 = vmatprep.subr.mxu0 0.0
  %106 = vmatpush1.msra.mxu0 0.0
  %107 = vmatprep.mubr.f32.mxu0 0.0
  %108 = vmatmul.mubr.f32.gmra.mrb[0].mxu0 %v37
  %v109 = vpop.f32.mrb[0].mxu0
  %v110 = vadd.f32 %v33, %v109
  %v111 = vpop.f32.mrb[0].mxu0
  %112 = vdwg.mxu0
  %v113 = vtanh.pop %v110
  %v114 = vld [vmem:[%s3] sm:$0xff]
  %v115 = vld [vmem:[%s3 + $0x8] sm:$0xff]
  %v116 = vld [vmem:[%s3 + $0x10] sm:$0xff]
  %v117 = vld [vmem:[%s3 + $0x18] sm:$0xff]
  %v118 = vld [vmem:[%s3 + $0x20] sm:$0xff]
  %v119 = vld [vmem:[%s3 + $0x28] sm:$0xff]
  %v120 = vld [vmem:[%s3 + $0x30] sm:$0xff]
  %v121 = vld [vmem:[%s3 + $0x38] sm:$0xff]
  %v122 = vld [vmem:[%s4] sm:$0x1]
  %v124 = vlaneseq
  %v125 = vshrl.u32 %v124, 7
  %v126 = vsub.s32 0, %v125
  %v127 = vrot.slane %v122, %v126
  %vm129 = vcmask 523264
  %v131 = vsel %vm129, %v113, 0
  %133 = vmatprep.subr.mxu0 0.0
  %134 = vmatpush1.msra.mxu0 %v114
  %135 = vmatprep.subr.mxu0 0.0
  %136 = vmatpush1.msra.mxu0 %v115
  %137 = vmatprep.subr.mxu0 0.0
  %138 = vmatpush1.msra.mxu0 %v116
  %139 = vmatprep.subr.mxu0 0.0
  %140 = vmatpush1.msra.mxu0 %v117
  %141 = vmatprep.subr.mxu0 0.0
  %142 = vmatpush1.msra.mxu0 %v118
  %143 = vmatprep.subr.mxu0 0.0
  %144 = vmatpush1.msra.mxu0 %v119
  %145 = vmatprep.subr.mxu0 0.0
  %146 = vmatpush1.msra.mxu0 %v120
  %147 = vmatprep.subr.mxu0 0.0
  %148 = vmatpush1.msra.mxu0 %v121
  %149 = vmatprep.subr.mxu0 0.0
  %150 = vmatpush1.msra.mxu0 0.0
  %151 = vmatprep.subr.mxu0 0.0
  %152 = vmatpush1.msra.mxu0 0.0
  %153 = vmatprep.subr.mxu0 0.0
  %154 = vmatpush1.msra.mxu0 0.0
  %155 = vmatprep.subr.mxu0 0.0
  %156 = vmatpush1.msra.mxu0 0.0
  %157 = vmatprep.subr.mxu0 0.0
  %158 = vmatpush1.msra.mxu0 0.0
  %159 = vmatprep.subr.mxu0 0.0
  %160 = vmatpush1.msra.mxu0 0.0
  %161 = vmatprep.subr.mxu0 0.0
  %162 = vmatpush1.msra.mxu0 0.0
  %163 = vmatprep.subr.mxu0 0.0
  %164 = vmatpush1.msra.mxu0 0.0
  %165 = vmatprep.subr.mxu0 0.0
  %166 = vmatpush1.msra.mxu0 0.0
  %167 = vmatprep.subr.mxu0 0.0
  %168 = vmatpush1.msra.mxu0 0.0
  %169 = vmatprep.subr.mxu0 0.0
  %170 = vmatpush1.msra.mxu0 0.0
  %171 = vmatprep.subr.mxu0 0.0
  %172 = vmatpush1.msra.mxu0 0.0
  %173 = vmatprep.subr.mxu0 0.0
  %174 = vmatpush1.msra.mxu0 0.0
  %175 = vmatprep.subr.mxu0 0.0
  %176 = vmatpush1.msra.mxu0 0.0
  %177 = vmatprep.subr.mxu0 0.0
  %178 = vmatpush1.msra.mxu0 0.0
  %179 = vmatprep.subr.mxu0 0.0
  %180 = vmatpush1.msra.mxu0 0.0
  %181 = vmatprep.subr.mxu0 0.0
  %182 = vmatpush1.msra.mxu0 0.0
  %183 = vmatprep.subr.mxu0 0.0
  %184 = vmatpush1.msra.mxu0 0.0
  %185 = vmatprep.subr.mxu0 0.0
  %186 = vmatpush1.msra.mxu0 0.0
  %187 = vmatprep.subr.mxu0 0.0
  %188 = vmatpush1.msra.mxu0 0.0
  %189 = vmatprep.subr.mxu0 0.0
  %190 = vmatpush1.msra.mxu0 0.0
  %191 = vmatprep.subr.mxu0 0.0
  %192 = vmatpush1.msra.mxu0 0.0
  %193 = vmatprep.subr.mxu0 0.0
  %194 = vmatpush1.msra.mxu0 0.0
  %195 = vmatprep.subr.mxu0 0.0
  %196 = vmatpush1.msra.mxu0 0.0
  %197 = vmatprep.mubr.f32.mxu0 0.0
  %198 = vmatmul.mubr.f32.gmra.mrb[0].mxu0 %v131
  %v199 = vpop.f32.mrb[0].mxu0
  %v200 = vadd.f32 %v127, %v199
  %v201 = vpop.f32.mrb[0].mxu0
  %202 = vdwg.mxu0
  %v203 = vtanh.pop %v200
  %v204 = vld [vmem:[%s5] sm:$0xff]
  %v205 = vld [vmem:[%s5 + $0x8] sm:$0xff]
  %v206 = vld [vmem:[%s5 + $0x10] sm:$0xff]
  %v207 = vld [vmem:[%s5 + $0x18] sm:$0xff]
  %v208 = vld [vmem:[%s5 + $0x20] sm:$0xff]
  %v209 = vld [vmem:[%s5 + $0x28] sm:$0xff]
  %v210 = vld [vmem:[%s5 + $0x30] sm:$0xff]
  %v211 = vld [vmem:[%s5 + $0x38] sm:$0xff]
  %v212 = vld [vmem:[%s6] sm:$0x1]
  %v214 = vlaneseq
  %v215 = vshrl.u32 %v214, 7
  %v216 = vsub.s32 0, %v215
  %v217 = vrot.slane %v212, %v216
  %v220 = vsel %vm129, %v203, 0
  %222 = vmatprep.subr.mxu0 0.0
  %223 = vmatpush1.msra.mxu0 %v204
  %224 = vmatprep.subr.mxu0 0.0
  %225 = vmatpush1.msra.mxu0 %v205
  %226 = vmatprep.subr.mxu0 0.0
  %227 = vmatpush1.msra.mxu0 %v206
  %228 = vmatprep.subr.mxu0 0.0
  %229 = vmatpush1.msra.mxu0 %v207
  %230 = vmatprep.subr.mxu0 0.0
  %231 = vmatpush1.msra.mxu0 %v208
  %232 = vmatprep.subr.mxu0 0.0
  %233 = vmatpush1.msra.mxu0 %v209
  %234 = vmatprep.subr.mxu0 0.0
  %235 = vmatpush1.msra.mxu0 %v210
  %236 = vmatprep.subr.mxu0 0.0
  %237 = vmatpush1.msra.mxu0 %v211
  %238 = vmatprep.subr.mxu0 0.0
  %239 = vmatpush1.msra.mxu0 0.0
  %240 = vmatprep.subr.mxu0 0.0
  %241 = vmatpush1.msra.mxu0 0.0
  %242 = vmatprep.subr.mxu0 0.0
  %243 = vmatpush1.msra.mxu0 0.0
  %244 = vmatprep.subr.mxu0 0.0
  %245 = vmatpush1.msra.mxu0 0.0
  %246 = vmatprep.subr.mxu0 0.0
  %247 = vmatpush1.msra.mxu0 0.0
  %248 = vmatprep.subr.mxu0 0.0
  %249 = vmatpush1.msra.mxu0 0.0
  %250 = vmatprep.subr.mxu0 0.0
  %251 = vmatpush1.msra.mxu0 0.0
  %252 = vmatprep.subr.mxu0 0.0
  %253 = vmatpush1.msra.mxu0 0.0
  %254 = vmatprep.subr.mxu0 0.0
  %255 = vmatpush1.msra.mxu0 0.0
  %256 = vmatprep.subr.mxu0 0.0
  %257 = vmatpush1.msra.mxu0 0.0
  %258 = vmatprep.subr.mxu0 0.0
  %259 = vmatpush1.msra.mxu0 0.0
  %260 = vmatprep.subr.mxu0 0.0
  %261 = vmatpush1.msra.mxu0 0.0
  %262 = vmatprep.subr.mxu0 0.0
  %263 = vmatpush1.msra.mxu0 0.0
  %264 = vmatprep.subr.mxu0 0.0
  %265 = vmatpush1.msra.mxu0 0.0
  %266 = vmatprep.subr.mxu0 0.0
  %267 = vmatpush1.msra.mxu0 0.0
  %268 = vmatprep.subr.mxu0 0.0
  %269 = vmatpush1.msra.mxu0 0.0
  %270 = vmatprep.subr.mxu0 0.0
  %271 = vmatpush1.msra.mxu0 0.0
  %272 = vmatprep.subr.mxu0 0.0
  %273 = vmatpush1.msra.mxu0 0.0
  %274 = vmatprep.subr.mxu0 0.0
  %275 = vmatpush1.msra.mxu0 0.0
  %276 = vmatprep.subr.mxu0 0.0
  %277 = vmatpush1.msra.mxu0 0.0
  %278 = vmatprep.subr.mxu0 0.0
  %279 = vmatpush1.msra.mxu0 0.0
  %280 = vmatprep.subr.mxu0 0.0
  %281 = vmatpush1.msra.mxu0 0.0
  %282 = vmatprep.subr.mxu0 0.0
  %283 = vmatpush1.msra.mxu0 0.0
  %284 = vmatprep.subr.mxu0 0.0
  %285 = vmatpush1.msra.mxu0 0.0
  %286 = vmatprep.mubr.f32.mxu0 0.0
  %287 = vmatmul.mubr.f32.gmra.mrb[0].mxu0 %v220
  %v288 = vpop.f32.mrb[0].mxu0
  %v289 = vadd.f32 %v217, %v288
  %v290 = vpop.f32.mrb[0].mxu0
  %291 = vdwg.mxu0
  %vm292 = vcmask 23552
  %293 = vst.msk [vmem:[%s7] sm:$0xff] %vm292, %v289
  // Predicated region
  $region30: #{tpu_custom_call.1} parent=0 // pred_check
    _
  $region31: #{tpu_custom_call.1} parent=0 // pred_check_branch
    %295 = sbr.rel (0) target = $region33
  $region32: #{tpu_custom_call.1} parent=0 // pred_region
    _
  $region33: #{tpu_custom_call.1} parent=0 // pred_fallthru
    _
  // Predicated region
  $region34: #{tpu_custom_call.1} parent=0 // pred_check
    _
  $region35: #{tpu_custom_call.1} parent=0 // pred_check_branch
    %297 = sbr.rel (0) target = $region37
  $region36: #{tpu_custom_call.1} parent=0 // pred_region
    _
  $region37: #{tpu_custom_call.1} parent=0 // pred_fallthru
    _

</llo_original>
